<compile_context>
chip_gen: v5e
topology: v5e:2x2
jax: 0.10.0
libtpu: 0.0.40
codegen_flags: <defaults>
</compile_context>

<pallas_src>
import jax
import jax.numpy as jnp
from jax.experimental import pallas as pl
from jax.experimental.pallas import tpu as pltpu

B, S, H, V = 4, 8, 256, 64        # batch, seq, hidden (multiple of 128), vocab


def _round_up(x, m):
    return (x + m - 1) // m * m


def eos_reward_kernel(x_ref, w1_ref, b1_ref, vhw_ref, o_ref, acc_ref):
    """grid = (gm, gk); K (contraction) axis last. Toy shapes -> grid (1, 1)."""
    k = pl.program_id(1)

    @pl.when(k == 0)
    def _():
        acc_ref[...] = jnp.zeros_like(acc_ref)

    # bf16 MXU matmul, f32 accumulation: this row-tile of last_hidden_state
    # (EOS rows only -- M is B_pad, not B*S).
    acc_ref[...] += jnp.dot(x_ref[...], w1_ref[...],
                            preferred_element_type=jnp.float32)

    @pl.when(k == pl.num_programs(1) - 1)
    def _():
        # Bias + GELU in f32 (VPU/EUP), once per row-tile.
        # TODO(synk): real HF backbones may use exact erf GELU; tanh approx is
        # used consistently in kernel + reference for the synthetic stand-in.
        y = jax.nn.gelu(acc_ref[...] + b1_ref[...], approximate=True)

        # v_head: per-row dot kept on the VPU multiply + lane-reduce path
        # (an MXU dot with N=1 would waste the whole systolic array).
        rowdot = jnp.sum(y * vhw_ref[...], axis=-1, keepdims=True)   # (tm, 1)

        # Lane-dense unmasked store; wrapper reads lane 0 of each row.
        o_ref[...] = jnp.broadcast_to(rowdot, o_ref.shape)


def _pick_tiles(mp, h):
    # Row tile: whole (padded) EOS batch when small, 256-row tiles otherwise.
    tm = mp if mp <= 256 else 256
    # Contraction tile: whole H when it fits comfortably, else fat 512/256
    # slabs (multiples of 256 keep the v6e/v7x 256x256 MXU full).
    if h <= 1024:
        tk = h
    elif h % 512 == 0:
        tk = 512
    elif h % 256 == 0:
        tk = 256
    else:
        tk = h
    return tm, tk


def gpt_reward_model_forward(input_ids, attention_mask, params):
    b, s = input_ids.shape
    _, h = params["wte"].shape
    assert h % 128 == 0, "hidden size must be lane-aligned (multiple of 128)"

    # ---- scalar / control path (plain JAX, negligible cost) ----------------
    # eos_ind = torch.argmin(attention_mask, axis=1)
    # TODO(synk): replicates the PyTorch footgun -- a fully-unmasked (all-ones)
    # row selects token 0, not the last token.
    eos_ind = jnp.argmin(attention_mask, axis=1)                        # (B,)
    eos_tok = input_ids[jnp.arange(b), eos_ind].astype(jnp.int32)       # (B,)

    # Gather ONLY the EOS-token embedding rows (B_pad * H, not B*S*H).
    mp = _round_up(max(b, 1), 16)          # bf16 sublane packing: 16-row pad
    if mp > 256:
        mp = _round_up(mp, 256)
    eos_tok_p = jnp.zeros((mp,), jnp.int32).at[:b].set(eos_tok)
    x_eos = params["wte"][eos_tok_p].astype(jnp.bfloat16)               # (MP, H)
    w1 = params["w1"].astype(jnp.bfloat16)                              # (H, H)
    b1 = params["b1"].astype(jnp.float32)                               # (1, H)
    vhw = params["v_head_w"].astype(jnp.float32)                        # (1, H)

    tm, tk = _pick_tiles(mp, h)
    gm, gk = mp // tm, h // tk

    # VMEM budget: double-buffered bf16 x / w1 tiles + f32 accumulator, checked
    # against a 32 MiB scoped limit that is valid on v5e/v6e and on v7x
    # (64 MiB physical / 32 MiB scoped).
    vmem_needed = (2 * (tm * tk + tk * h) * 2      # x, w1 tiles (bf16, 2 bufs)
                   + tm * h * 4                    # f32 accumulator
                   + 2 * 2 * h * 4                 # b1, v_head weight (2 bufs)
                   + 2 * tm * 128 * 4)             # output blocks
    vmem_limit = 32 * 1024 * 1024
    assert vmem_needed < vmem_limit - (2 << 20), (
        f"tile footprint {vmem_needed} B too large; shrink tk/tm")

    cost = pl.CostEstimate(
        flops=2 * mp * h * h + 2 * mp * h,
        transcendentals=mp * h,
        bytes_accessed=(mp * h * 2            # x_eos (read once)
                        + gm * h * h * 2      # w1 (re-read per row tile)
                        + gm * 2 * h * 4      # b1 + v_head weight
                        + mp * 128 * 4))      # output

    out = pl.pallas_call(
        eos_reward_kernel,
        out_shape=jax.ShapeDtypeStruct((mp, 128), jnp.float32),
        grid_spec=pltpu.PrefetchScalarGridSpec(
            num_scalar_prefetch=0,
            grid=(gm, gk),
            in_specs=[
                pl.BlockSpec((tm, tk), lambda i, k: (i, k)),   # x_eos (bf16)
                pl.BlockSpec((tk, h), lambda i, k: (k, 0)),    # w1 (bf16)
                pl.BlockSpec((1, h), lambda i, k: (0, 0)),     # b1 (f32)
                pl.BlockSpec((1, h), lambda i, k: (0, 0)),     # v_head weight
            ],
            out_specs=pl.BlockSpec((tm, 128), lambda i, k: (i, 0)),
            scratch_shapes=[pltpu.VMEM((tm, h), jnp.float32)],
        ),
        compiler_params=pltpu.CompilerParams(
            dimension_semantics=("parallel", "arbitrary"),
            vmem_limit_bytes=vmem_limit),
        cost_estimate=cost,
    )(x_eos, w1, b1, vhw)

    return out[:b, 0]                                                    # (B,)


def reference_forward(input_ids, attention_mask, params):
    # Pure-JAX reference mirroring the PyTorch forward semantics (full-token
    # backbone, then EOS-row select), at the same bf16-matmul precision.
    b, s = input_ids.shape
    x = params["wte"][input_ids].astype(jnp.bfloat16)                    # (B,S,H)
    w1 = params["w1"].astype(jnp.bfloat16)
    hidden = jax.nn.gelu(
        jnp.dot(x, w1, preferred_element_type=jnp.float32)
        + params["b1"][0].astype(jnp.float32),
        approximate=True)                                                # (B,S,H)
    eos_ind = jnp.argmin(attention_mask, axis=1)                         # (B,)
    picked = hidden[jnp.arange(b), eos_ind]                              # (B,H)
    return jnp.sum(picked * params["v_head_w"][0].astype(jnp.float32), axis=-1)


if __name__ == "__main__":
    key = jax.random.PRNGKey(0)
    k_ids, k_wte, k_w1, k_b1, k_vh = jax.random.split(key, 5)

    input_ids = jax.random.randint(k_ids, (B, S), 0, V, dtype=jnp.int32)
    # attention_mask: 1s then 0s; the full-length row exercises the argmin->0 case.
    lengths = jnp.array([5, 8, 3, 7], dtype=jnp.int32)
    attention_mask = (jnp.arange(S)[None, :] < lengths[:, None]).astype(jnp.int32)

    params = {
        "wte": jax.random.normal(k_wte, (V, H), jnp.float32) * 0.1,
        "w1": jax.random.normal(k_w1, (H, H), jnp.float32) * 0.1,
        "b1": jax.random.normal(k_b1, (1, H), jnp.float32) * 0.1,
        "v_head_w": jax.random.normal(k_vh, (1, H), jnp.float32) * 0.1,
    }

    out = jax.block_until_ready(
        gpt_reward_model_forward(input_ids, attention_mask, params))
    ref = jax.block_until_ready(
        reference_forward(input_ids, attention_mask, params))

    assert out.shape == (B,), out.shape
    assert jnp.allclose(out, ref, atol=1e-3, rtol=1e-3), (out, ref)
    print("KERNEL_OK")
</pallas_src>

<mosaic_0001>
module attributes {stable_mosaic.version = 11 : i64} {
  func.func @eos_reward_kernel(%arg0: i32, %arg1: i32, %arg2: memref<16x256xbf16, #tpu.memory_space<vmem>>, %arg3: memref<256x256xbf16, #tpu.memory_space<vmem>>, %arg4: memref<1x256xf32, #tpu.memory_space<vmem>>, %arg5: memref<1x256xf32, #tpu.memory_space<vmem>>, %arg6: memref<16x128xf32, #tpu.memory_space<vmem>>, %arg7: memref<16x256xf32, #tpu.memory_space<vmem>>) attributes {dimension_semantics = [#tpu.dimension_semantics<parallel>, #tpu.dimension_semantics<arbitrary>], iteration_bounds = array<i64: 1, 1>, scalar_prefetch = 0 : i64, scratch_operands = 1 : i64, tpu.core_type = #tpu.core_type<tc>, window_params = [{transform_indices = @transform_0, window_bounds = array<i64: 16, 256>}, {transform_indices = @transform_1, window_bounds = array<i64: 256, 256>}, {pipeline_mode = #tpu.pipeline_mode<synchronous>, transform_indices = @transform_2, window_bounds = array<i64: 1, 256>}, {pipeline_mode = #tpu.pipeline_mode<synchronous>, transform_indices = @transform_3, window_bounds = array<i64: 1, 256>}, {transform_indices = @transform_4, window_bounds = array<i64: 16, 128>}]} {
    %c0_i32 = arith.constant 0 : i32
    %0 = arith.cmpi eq, %arg1, %c0_i32 : i32
    %1 = arith.extui %0 : i1 to i32
    %c0_i32_0 = arith.constant 0 : i32
    %2 = arith.cmpi ne, %1, %c0_i32_0 : i32
    scf.if %2 {
      %cst_10 = arith.constant 0.000000e+00 : f32
      %12 = vector.broadcast %cst_10 : f32 to vector<16x256xf32>
      %c0_11 = arith.constant 0 : index
      %c0_12 = arith.constant 0 : index
      %13 = vector.load %arg7[%c0_11, %c0_12] : memref<16x256xf32, #tpu.memory_space<vmem>>, vector<16x256xf32>
      tpu.vector_store %arg7[%c0_11, %c0_12], %12 {strides = array<i32>} : memref<16x256xf32, #tpu.memory_space<vmem>>, vector<16x256xf32>,
    } else {
    }
    %c0 = arith.constant 0 : index
    %c0_1 = arith.constant 0 : index
    %3 = vector.load %arg7[%c0, %c0_1] : memref<16x256xf32, #tpu.memory_space<vmem>>, vector<16x256xf32>
    %c0_2 = arith.constant 0 : index
    %c0_3 = arith.constant 0 : index
    %4 = vector.load %arg2[%c0_2, %c0_3] : memref<16x256xbf16, #tpu.memory_space<vmem>>, vector<16x256xbf16>
    %c0_4 = arith.constant 0 : index
    %c0_5 = arith.constant 0 : index
    %5 = vector.load %arg3[%c0_4, %c0_5] : memref<256x256xbf16, #tpu.memory_space<vmem>>, vector<256x256xbf16>
    %cst = arith.constant dense<0.000000e+00> : vector<16x256xf32>
    %6 = tpu.matmul %4, %5, %cst {dimension_numbers = #tpu.dot_dimension_numbers<[1], [0], [0], [1], [0, 0, 1, 1], [], []>} : vector<16x256xbf16>, vector<256x256xbf16>, vector<16x256xf32> -> vector<16x256xf32>
    %7 = arith.addf %3, %6 : vector<16x256xf32>
    %c0_6 = arith.constant 0 : index
    %c0_7 = arith.constant 0 : index
    %8 = vector.load %arg7[%c0_6, %c0_7] : memref<16x256xf32, #tpu.memory_space<vmem>>, vector<16x256xf32>
    tpu.vector_store %arg7[%c0_6, %c0_7], %7 {strides = array<i32>} : memref<16x256xf32, #tpu.memory_space<vmem>>, vector<16x256xf32>,
    %c0_i32_8 = arith.constant 0 : i32
    %9 = arith.cmpi eq, %arg1, %c0_i32_8 : i32
    %10 = arith.extui %9 : i1 to i32
    %c0_i32_9 = arith.constant 0 : i32
    %11 = arith.cmpi ne, %10, %c0_i32_9 : i32
    scf.if %11 {
      %c0_10 = arith.constant 0 : index
      %c0_11 = arith.constant 0 : index
      %12 = vector.load %arg7[%c0_10, %c0_11] : memref<16x256xf32, #tpu.memory_space<vmem>>, vector<16x256xf32>
      %c0_12 = arith.constant 0 : index
      %c0_13 = arith.constant 0 : index
      %13 = vector.load %arg4[%c0_12, %c0_13] : memref<1x256xf32, #tpu.memory_space<vmem>>, vector<1x256xf32>
      %14 = vector.broadcast %13 : vector<1x256xf32> to vector<16x256xf32>
      %15 = arith.addf %12, %14 : vector<16x256xf32>
      %16 = arith.mulf %15, %15 : vector<16x256xf32>
      %17 = arith.mulf %15, %16 : vector<16x256xf32>
      %cst_14 = arith.constant 4.471500e-02 : f32
      %18 = vector.broadcast %cst_14 : f32 to vector<16x256xf32>
      %19 = arith.mulf %18, %17 : vector<16x256xf32>
      %20 = arith.addf %15, %19 : vector<16x256xf32>
      %cst_15 = arith.constant 0.797884583 : f32
      %21 = vector.broadcast %cst_15 : f32 to vector<16x256xf32>
      %22 = arith.mulf %21, %20 : vector<16x256xf32>
      %23 = math.tanh %22 : vector<16x256xf32>
      %cst_16 = arith.constant 1.000000e+00 : f32
      %24 = vector.broadcast %cst_16 : f32 to vector<16x256xf32>
      %25 = arith.addf %24, %23 : vector<16x256xf32>
      %cst_17 = arith.constant 5.000000e-01 : f32
      %26 = vector.broadcast %cst_17 : f32 to vector<16x256xf32>
      %27 = arith.mulf %26, %25 : vector<16x256xf32>
      %28 = arith.mulf %15, %27 : vector<16x256xf32>
      %c0_18 = arith.constant 0 : index
      %c0_19 = arith.constant 0 : index
      %29 = vector.load %arg5[%c0_18, %c0_19] : memref<1x256xf32, #tpu.memory_space<vmem>>, vector<1x256xf32>
      %30 = vector.broadcast %29 : vector<1x256xf32> to vector<16x256xf32>
      %31 = arith.mulf %28, %30 : vector<16x256xf32>
      %cst_20 = arith.constant dense<0.000000e+00> : vector<16xf32>
      %32 = vector.multi_reduction <add>, %31, %cst_20 [1] : vector<16x256xf32> to vector<16xf32>
      %33 = vector.shape_cast %32 : vector<16xf32> to vector<16x1xf32>
      %34 = vector.shape_cast %33 : vector<16x1xf32> to vector<16x1xf32>
      %35 = vector.broadcast %34 : vector<16x1xf32> to vector<16x128xf32>
      %c0_21 = arith.constant 0 : index
      %c0_22 = arith.constant 0 : index
      %36 = vector.load %arg6[%c0_21, %c0_22] : memref<16x128xf32, #tpu.memory_space<vmem>>, vector<16x128xf32>
      tpu.vector_store %arg6[%c0_21, %c0_22], %35 {strides = array<i32>} : memref<16x128xf32, #tpu.memory_space<vmem>>, vector<16x128xf32>,
    } else {
    }
    return
  }
  func.func @transform_0(%arg0: i32, %arg1: i32) -> (i32, i32) {
    %c0_i32 = arith.constant 0 : i32
    return %arg0, %arg1 : i32, i32
  }
  func.func @transform_1(%arg0: i32, %arg1: i32) -> (i32, i32) {
    %c0_i32 = arith.constant 0 : i32
    %c0_i32_0 = arith.constant 0 : i32
    return %arg1, %c0_i32 : i32, i32
  }
  func.func @transform_2(%arg0: i32, %arg1: i32) -> (i32, i32) {
    %c0_i32 = arith.constant 0 : i32
    %c0_i32_0 = arith.constant 0 : i32
    %c0_i32_1 = arith.constant 0 : i32
    return %c0_i32, %c0_i32_0 : i32, i32
  }
  func.func @transform_3(%arg0: i32, %arg1: i32) -> (i32, i32) {
    %c0_i32 = arith.constant 0 : i32
    %c0_i32_0 = arith.constant 0 : i32
    %c0_i32_1 = arith.constant 0 : i32
    return %c0_i32, %c0_i32_0 : i32, i32
  }
  func.func @transform_4(%arg0: i32, %arg1: i32) -> (i32, i32) {
    %c0_i32 = arith.constant 0 : i32
    %c0_i32_0 = arith.constant 0 : i32
    return %arg0, %c0_i32 : i32, i32
  }
}

</mosaic_0001>

<llo_original>
// kernel: tpu_custom_call.1
$region0: #{tpu_custom_call.1}
  #allocation0 [shape = 'u32[]', space=smem, size = 0x4, offset = 0x4, fixed_abs, tag = 'smem constant byte address 0x4 - core index']
  #allocation1 [shape = 'u32[72,128]{1,0:T(1,128)}', space=vmem, size = 0x9000, scoped, tag = 'internal scratch']
  #allocation2 [shape = 'f32[16,256]{1,0:T(8,128)}', space=vmem, size = 0x4000, scoped, tag = 'scratch operand']
  %s0 = inlined_call_operand.hbm [shape: bf16[16,256], index: 0, kind: input, shape index: {}]
  %s1 = inlined_call_operand.hbm [shape: bf16[256,256], index: 1, kind: input, shape index: {}]
  %s2 = inlined_call_operand.hbm [shape: f32[1,256], index: 2, kind: input, shape index: {}]
  %s3 = inlined_call_operand.vmem [shape: f32[1,256], index: 3, kind: input, shape index: {}]
  %s4 = inlined_call_operand.hbm [shape: f32[16,128], index: 4, kind: output, shape index: {}]
  %s5 = sld [smem:[#allocation0]]
  $region46: #{tpu_custom_call.1} parent=0
    _
  %s7 = ssub.s32 1, %s5
  %s8 = scalar_select 0, %s7, %s5
  $region1: #{tpu_custom_call.1} parent=0
    #allocation3 [shape = 'u8[8192]{0}', space=vmem, size = 0x2000, scoped, tag = 'input window, operand 0, single buffered']
    #allocation4 [shape = 's32[1]{0}', space=sflag, size = 0x4, scoped, tag = 'scoped memory for tpu_custom_call.1']
    #allocation5 [shape = 's32[1]{0}', space=sflag, size = 0x4, scoped, tag = 'scoped memory for tpu_custom_call.1']
    #allocation6 [shape = 'u8[131072]{0}', space=vmem, size = 0x20000, scoped, tag = 'input window, operand 1, single buffered']
    #allocation7 [shape = 's32[1]{0}', space=sflag, size = 0x4, scoped, tag = 'scoped memory for tpu_custom_call.1']
    #allocation8 [shape = 'u8[1024]{0}', space=vmem, size = 0x400, scoped, tag = 'input window, operand 2, single buffered']
    #allocation9 [shape = 'u8[8192]{0}', space=vmem, size = 0x2000, scoped, tag = 'output window, operand 0, single buffered']
    %9 = vsyncpa [#allocation4], 0
    %10 = vsyncpa [#allocation7], 0
    %11 = vsyncpa [#allocation5], 0
    // Predicated region
    $region2: #{tpu_custom_call.1} parent=1 // pred_check
      _
    $region3: #{tpu_custom_call.1} parent=1 // pred_check_branch
      %13 = sbr.rel (0) target = $region5
    $region4: #{tpu_custom_call.1} parent=1 // pred_region
      %15 = vsyncadd [#allocation4], 0
      %s16 = sshll.u32 %s0, 4
      %s17 = int_to_ptr.hbm [resolvable:$true] %s16
      %s18 = sshll.u32 [#allocation3], 4
      %s19 = int_to_ptr.vmem [resolvable:$true] %s18
      %24 = dma.hbm_to_vmem [thread:$0]  %s17, 256, %s19, [#allocation4], 128, 128, 8
    $region5: #{tpu_custom_call.1} parent=1 // pred_fallthru
      _
    // Predicated region
    $region6: #{tpu_custom_call.1} parent=1 // pred_check
      _
    $region7: #{tpu_custom_call.1} parent=1 // pred_check_branch
      %26 = sbr.rel (0) target = $region9
    $region8: #{tpu_custom_call.1} parent=1 // pred_region
      %28 = vsyncadd [#allocation7], 0
      %s29 = sshll.u32 %s1, 4
      %s30 = int_to_ptr.hbm [resolvable:$true] %s29
      %s31 = sshll.u32 [#allocation6], 4
      %s32 = int_to_ptr.vmem [resolvable:$true] %s31
      %37 = dma.hbm_to_vmem [thread:$0]  %s30, 4096, %s32, [#allocation7], 128, 128, 8
    $region9: #{tpu_custom_call.1} parent=1 // pred_fallthru
      _
    // Predicated region
    $region10: #{tpu_custom_call.1} parent=1 // pred_check
      _
    $region11: #{tpu_custom_call.1} parent=1 // pred_check_branch
      %39 = sbr.rel (0) target = $region13
    $region12: #{tpu_custom_call.1} parent=1 // pred_region
      %41 = vsyncadd [#allocation7], 0
      %s43 = sshll.u32 %s2, 4
      %s44 = int_to_ptr.hbm [resolvable:$true] %s43
      %s45 = sshll.u32 [#allocation8], 4
      %s46 = int_to_ptr.vmem [resolvable:$true] %s45
      %48 = dma.hbm_to_vmem [thread:$0]  %s44, 32, %s46, [#allocation7]
    $region13: #{tpu_custom_call.1} parent=1 // pred_fallthru
      _
    // Predicated region
    $region14: #{tpu_custom_call.1} parent=1 // pred_check
      _
    $region15: #{tpu_custom_call.1} parent=1 // pred_check_branch
      %50 = sbr.rel (0) target = $region17
    $region16: #{tpu_custom_call.1} parent=1 // pred_region
      _
    $region17: #{tpu_custom_call.1} parent=1 // pred_fallthru
      _
    // Predicated region
    $region18: #{tpu_custom_call.1} parent=1 // pred_check
      _
    $region19: #{tpu_custom_call.1} parent=1 // pred_check_branch
      %52 = sbr.rel (0) target = $region21
    $region20: #{tpu_custom_call.1} parent=1 // pred_region
      %54 = dma.done [#allocation4], 256
    $region21: #{tpu_custom_call.1} parent=1 // pred_fallthru
      _
    // Predicated region
    $region22: #{tpu_custom_call.1} parent=1 // pred_check
      _
    $region23: #{tpu_custom_call.1} parent=1 // pred_check_branch
      %56 = sbr.rel (0) target = $region25
    $region24: #{tpu_custom_call.1} parent=1 // pred_region
      %58 = dma.done [#allocation7], 4096
    $region25: #{tpu_custom_call.1} parent=1 // pred_fallthru
      _
    // Predicated region
    $region26: #{tpu_custom_call.1} parent=1 // pred_check
      _
    $region27: #{tpu_custom_call.1} parent=1 // pred_check_branch
      %60 = sbr.rel (0) target = $region29
    $region28: #{tpu_custom_call.1} parent=1 // pred_region
      %62 = dma.done [#allocation7], 32
    $region29: #{tpu_custom_call.1} parent=1 // pred_fallthru
      _
    %p63 = scmp.eq.s32.totalorder 0, 0
    // Predicated region
    $region30: #{tpu_custom_call.1} parent=1 // pred_check
      %p64 = pneg %p63
    $region31: #{tpu_custom_call.1} parent=1 // pred_check_branch
      %66 = sbr.rel (%p64) target = $region33
    $region32: #{tpu_custom_call.1} parent=1 // pred_region
      %67 = vst [vmem:[#allocation2] sm:$0xff] 0.0
      %68 = vst [vmem:[#allocation2 + $0x8] sm:$0xff] 0.0
      %69 = vst [vmem:[#allocation2 + $0x10] sm:$0xff] 0.0
      %70 = vst [vmem:[#allocation2 + $0x18] sm:$0xff] 0.0
    $region33: #{tpu_custom_call.1} parent=1 // pred_fallthru
      _
    %v71 = vld [vmem:[#allocation2] sm:$0xff]
    %v72 = vld [vmem:[#allocation2 + $0x8] sm:$0xff]
    %v73 = vld [vmem:[#allocation2 + $0x10] sm:$0xff]
    %v74 = vld [vmem:[#allocation2 + $0x18] sm:$0xff]
    %v75 = vld [vmem:[#allocation3] sm:$0xff]
    %v76 = vld [vmem:[#allocation3 + $0x8] sm:$0xff]
    %v77 = vld [vmem:[#allocation6] sm:$0xff]
    %v78 = vld [vmem:[#allocation6 + $0x8] sm:$0xff]
    %v79 = vld [vmem:[#allocation6 + $0x10] sm:$0xff]
    %v80 = vld [vmem:[#allocation6 + $0x18] sm:$0xff]
    %v81 = vld [vmem:[#allocation6 + $0x20] sm:$0xff]
    %v82 = vld [vmem:[#allocation6 + $0x28] sm:$0xff]
    %v83 = vld [vmem:[#allocation6 + $0x30] sm:$0xff]
    %v84 = vld [vmem:[#allocation6 + $0x38] sm:$0xff]
    %v85 = vld [vmem:[#allocation6 + $0x40] sm:$0xff]
    %v86 = vld [vmem:[#allocation6 + $0x48] sm:$0xff]
    %v87 = vld [vmem:[#allocation6 + $0x50] sm:$0xff]
    %v88 = vld [vmem:[#allocation6 + $0x58] sm:$0xff]
    %v89 = vld [vmem:[#allocation6 + $0x60] sm:$0xff]
    %v90 = vld [vmem:[#allocation6 + $0x68] sm:$0xff]
    %v91 = vld [vmem:[#allocation6 + $0x70] sm:$0xff]
    %v92 = vld [vmem:[#allocation6 + $0x78] sm:$0xff]
    %v93 = vld [vmem:[#allocation6 + $0x80] sm:$0xff]
    %v94 = vld [vmem:[#allocation6 + $0x88] sm:$0xff]
    %v95 = vld [vmem:[#allocation6 + $0x90] sm:$0xff]
    %v96 = vld [vmem:[#allocation6 + $0x98] sm:$0xff]
    %v97 = vld [vmem:[#allocation6 + $0xa0] sm:$0xff]
    %v98 = vld [vmem:[#allocation6 + $0xa8] sm:$0xff]
    %v99 = vld [vmem:[#allocation6 + $0xb0] sm:$0xff]
    %v100 = vld [vmem:[#allocation6 + $0xb8] sm:$0xff]
    %v101 = vld [vmem:[#allocation6 + $0xc0] sm:$0xff]
    %v102 = vld [vmem:[#allocation6 + $0xc8] sm:$0xff]
    %v103 = vld [vmem:[#allocation6 + $0xd0] sm:$0xff]
    %v104 = vld [vmem:[#allocation6 + $0xd8] sm:$0xff]
    %v105 = vld [vmem:[#allocation6 + $0xe0] sm:$0xff]
    %v106 = vld [vmem:[#allocation6 + $0xe8] sm:$0xff]
    %v107 = vld [vmem:[#allocation6 + $0xf0] sm:$0xff]
    %v108 = vld [vmem:[#allocation6 + $0xf8] sm:$0xff]
    %v111 = vunpack.c.l.b16 %v75
    %v112 = vunpack.c.h.b16 %v75
    %v113 = vunpack.c.l.b16 %v76
    %v114 = vunpack.c.h.b16 %v76
    %v115 = vpack.c.b16 %v113, %v111
    %v116 = vpack.c.b16 %v114, %v112
    %v151 = vunpack.c.l.b16 %v77
    %v152 = vunpack.c.h.b16 %v77
    %v153 = vunpack.c.l.b16 %v78
    %v154 = vunpack.c.h.b16 %v78
    %v155 = vunpack.c.l.b16 %v79
    %v156 = vunpack.c.h.b16 %v79
    %v157 = vunpack.c.l.b16 %v80
    %v158 = vunpack.c.h.b16 %v80
    %v159 = vunpack.c.l.b16 %v81
    %v160 = vunpack.c.h.b16 %v81
    %v161 = vunpack.c.l.b16 %v82
    %v162 = vunpack.c.h.b16 %v82
    %v163 = vunpack.c.l.b16 %v83
    %v164 = vunpack.c.h.b16 %v83
    %v165 = vunpack.c.l.b16 %v84
    %v166 = vunpack.c.h.b16 %v84
    %v167 = vunpack.c.l.b16 %v85
    %v168 = vunpack.c.h.b16 %v85
    %v169 = vunpack.c.l.b16 %v86
    %v170 = vunpack.c.h.b16 %v86
    %v171 = vunpack.c.l.b16 %v87
    %v172 = vunpack.c.h.b16 %v87
    %v173 = vunpack.c.l.b16 %v88
    %v174 = vunpack.c.h.b16 %v88
    %v175 = vunpack.c.l.b16 %v89
    %v176 = vunpack.c.h.b16 %v89
    %v177 = vunpack.c.l.b16 %v90
    %v178 = vunpack.c.h.b16 %v90
    %v179 = vunpack.c.l.b16 %v91
    %v180 = vunpack.c.h.b16 %v91
    %v181 = vunpack.c.l.b16 %v92
    %v182 = vunpack.c.h.b16 %v92
    %v183 = vunpack.c.l.b16 %v93
    %v184 = vunpack.c.h.b16 %v93
    %v185 = vunpack.c.l.b16 %v94
    %v186 = vunpack.c.h.b16 %v94
    %v187 = vunpack.c.l.b16 %v95
    %v188 = vunpack.c.h.b16 %v95
    %v189 = vunpack.c.l.b16 %v96
    %v190 = vunpack.c.h.b16 %v96
    %v191 = vunpack.c.l.b16 %v97
    %v192 = vunpack.c.h.b16 %v97
    %v193 = vunpack.c.l.b16 %v98
    %v194 = vunpack.c.h.b16 %v98
    %v195 = vunpack.c.l.b16 %v99
    %v196 = vunpack.c.h.b16 %v99
    %v197 = vunpack.c.l.b16 %v100
    %v198 = vunpack.c.h.b16 %v100
    %v199 = vunpack.c.l.b16 %v101
    %v200 = vunpack.c.h.b16 %v101
    %v201 = vunpack.c.l.b16 %v102
    %v202 = vunpack.c.h.b16 %v102
    %v203 = vunpack.c.l.b16 %v103
    %v204 = vunpack.c.h.b16 %v103
    %v205 = vunpack.c.l.b16 %v104
    %v206 = vunpack.c.h.b16 %v104
    %v207 = vunpack.c.l.b16 %v105
    %v208 = vunpack.c.h.b16 %v105
    %v209 = vunpack.c.l.b16 %v106
    %v210 = vunpack.c.h.b16 %v106
    %v211 = vunpack.c.l.b16 %v107
    %v212 = vunpack.c.h.b16 %v107
    %v213 = vunpack.c.l.b16 %v108
    %v214 = vunpack.c.h.b16 %v108
    %v215 = vpack.c.b16 %v153, %v151
    %v216 = vpack.c.b16 %v154, %v152
    %v217 = vpack.c.b16 %v157, %v155
    %v218 = vpack.c.b16 %v158, %v156
    %v219 = vpack.c.b16 %v161, %v159
    %v220 = vpack.c.b16 %v162, %v160
    %v221 = vpack.c.b16 %v165, %v163
    %v222 = vpack.c.b16 %v166, %v164
    %v223 = vpack.c.b16 %v169, %v167
    %v224 = vpack.c.b16 %v170, %v168
    %v225 = vpack.c.b16 %v173, %v171
    %v226 = vpack.c.b16 %v174, %v172
    %v227 = vpack.c.b16 %v177, %v175
    %v228 = vpack.c.b16 %v178, %v176
    %v229 = vpack.c.b16 %v181, %v179
    %v230 = vpack.c.b16 %v182, %v180
    %v231 = vpack.c.b16 %v185, %v183
    %v232 = vpack.c.b16 %v186, %v184
    %v233 = vpack.c.b16 %v189, %v187
    %v234 = vpack.c.b16 %v190, %v188
    %v235 = vpack.c.b16 %v193, %v191
    %v236 = vpack.c.b16 %v194, %v192
    %v237 = vpack.c.b16 %v197, %v195
    %v238 = vpack.c.b16 %v198, %v196
    %v239 = vpack.c.b16 %v201, %v199
    %v240 = vpack.c.b16 %v202, %v200
    %v241 = vpack.c.b16 %v205, %v203
    %v242 = vpack.c.b16 %v206, %v204
    %v243 = vpack.c.b16 %v209, %v207
    %v244 = vpack.c.b16 %v210, %v208
    %v245 = vpack.c.b16 %v213, %v211
    %v246 = vpack.c.b16 %v214, %v212
    %279 = vmatpush.bf16.msra.mxu0 %v229
    %280 = vmatpush.bf16.msra.mxu0 %v227
    %281 = vmatpush.bf16.msra.mxu0 %v225
    %282 = vmatpush.bf16.msra.mxu0 %v223
    %283 = vmatpush.bf16.msra.mxu0 %v221
    %284 = vmatpush.bf16.msra.mxu0 %v219
    %285 = vmatpush.bf16.msra.mxu0 %v217
    %286 = vmatpush.bf16.msra.mxu0 %v215
    %287 = vmatmul.bf16.gmra.mxu0 %v115
    %v288 = vpop.f32.mrf.mxu0
    %v289 = vadd.f32 0.0, %v288
    %v290 = vpop.f32.mrf.mxu0
    %v291 = vadd.f32 0.0, %v290
    %292 = vdwg.mxu0
    %293 = vmatpush.bf16.msra.mxu0 %v245
    %294 = vmatpush.bf16.msra.mxu0 %v243
    %295 = vmatpush.bf16.msra.mxu0 %v241
    %296 = vmatpush.bf16.msra.mxu0 %v239
    %297 = vmatpush.bf16.msra.mxu0 %v237
    %298 = vmatpush.bf16.msra.mxu0 %v235
    %299 = vmatpush.bf16.msra.mxu0 %v233
    %300 = vmatpush.bf16.msra.mxu0 %v231
    %301 = vmatmul.bf16.gmra.mxu0 %v116
    %v302 = vpop.f32.mrf.mxu0
    %v303 = vadd.f32 %v289, %v302
    %v304 = vpop.f32.mrf.mxu0
    %v305 = vadd.f32 %v291, %v304
    %306 = vdwg.mxu0
    %307 = vmatpush.bf16.msra.mxu0 %v230
    %308 = vmatpush.bf16.msra.mxu0 %v228
    %309 = vmatpush.bf16.msra.mxu0 %v226
    %310 = vmatpush.bf16.msra.mxu0 %v224
    %311 = vmatpush.bf16.msra.mxu0 %v222
    %312 = vmatpush.bf16.msra.mxu0 %v220
    %313 = vmatpush.bf16.msra.mxu0 %v218
    %314 = vmatpush.bf16.msra.mxu0 %v216
    %315 = vmatmul.bf16.gmra.mxu0 %v115
    %v316 = vpop.f32.mrf.mxu0
    %v317 = vadd.f32 0.0, %v316
    %v318 = vpop.f32.mrf.mxu0
    %v319 = vadd.f32 0.0, %v318
    %320 = vdwg.mxu0
    %321 = vmatpush.bf16.msra.mxu0 %v246
    %322 = vmatpush.bf16.msra.mxu0 %v244
    %323 = vmatpush.bf16.msra.mxu0 %v242
    %324 = vmatpush.bf16.msra.mxu0 %v240
    %325 = vmatpush.bf16.msra.mxu0 %v238
    %326 = vmatpush.bf16.msra.mxu0 %v236
    %327 = vmatpush.bf16.msra.mxu0 %v234
    %328 = vmatpush.bf16.msra.mxu0 %v232
    %329 = vmatmul.bf16.gmra.mxu0 %v116
    %v330 = vpop.f32.mrf.mxu0
    %v331 = vadd.f32 %v317, %v330
    %v332 = vpop.f32.mrf.mxu0
    %v333 = vadd.f32 %v319, %v332
    %334 = vdwg.mxu0
    %v335 = vadd.f32 %v71, %v303
    %v336 = vadd.f32 %v72, %v331
    %v337 = vadd.f32 %v73, %v305
    %v338 = vadd.f32 %v74, %v333
    %339 = vst [vmem:[#allocation2] sm:$0xff] %v335
    %340 = vst [vmem:[#allocation2 + $0x8] sm:$0xff] %v336
    %341 = vst [vmem:[#allocation2 + $0x10] sm:$0xff] %v337
    %342 = vst [vmem:[#allocation2 + $0x18] sm:$0xff] %v338
    // Predicated region
    $region34: #{tpu_custom_call.1} parent=1 // pred_check
      %p343 = pneg %p63
    $region35: #{tpu_custom_call.1} parent=1 // pred_check_branch
      %345 = sbr.rel (%p343) target = $region37
    $region36: #{tpu_custom_call.1} parent=1 // pred_region
      %v346 = vld [vmem:[#allocation2] sm:$0xff]
      %v347 = vld [vmem:[#allocation2 + $0x8] sm:$0xff]
      %v348 = vld [vmem:[#allocation2 + $0x10] sm:$0xff]
      %v349 = vld [vmem:[#allocation2 + $0x18] sm:$0xff]
      %v350 = vld [vmem:[#allocation8] sm:$0x3]
      %v352 = vperm.slane %v350, 0
      %v353 = vperm.slane %v350, 1
      %v356 = vadd.f32 %v346, %v352
      %v357 = vadd.f32 %v347, %v353
      %v358 = vadd.f32 %v348, %v352
      %v359 = vadd.f32 %v349, %v353
      %v360 = vmul.f32 %v356, %v356
      %v361 = vmul.f32 %v357, %v357
      %v362 = vmul.f32 %v358, %v358
      %v363 = vmul.f32 %v359, %v359
      %v364 = vmul.f32 %v356, %v360
      %v365 = vmul.f32 %v357, %v361
      %v366 = vmul.f32 %v358, %v362
      %v367 = vmul.f32 %v359, %v363
      %v368 = vmul.f32 %v364, 0.044715
      %v369 = vmul.f32 %v365, 0.044715
      %v370 = vmul.f32 %v366, 0.044715
      %v371 = vmul.f32 %v367, 0.044715
      %v372 = vadd.f32 %v356, %v368
      %v373 = vadd.f32 %v357, %v369
      %v374 = vadd.f32 %v358, %v370
      %v375 = vadd.f32 %v359, %v371
      %v376 = vmul.f32 %v372, 0.7978846
      %v377 = vmul.f32 %v373, 0.7978846
      %v378 = vmul.f32 %v374, 0.7978846
      %v379 = vmul.f32 %v375, 0.7978846
      %v380 = vtanh.pop %v376
      %v381 = vtanh.pop %v377
      %v382 = vtanh.pop %v378
      %v383 = vtanh.pop %v379
      %v384 = vadd.f32 %v380, 1.0
      %v385 = vadd.f32 %v381, 1.0
      %v386 = vadd.f32 %v382, 1.0
      %v387 = vadd.f32 %v383, 1.0
      %v388 = vmul.f32 %v384, 0.5
      %v389 = vmul.f32 %v385, 0.5
      %v390 = vmul.f32 %v386, 0.5
      %v391 = vmul.f32 %v387, 0.5
      %v392 = vmul.f32 %v356, %v388
      %v393 = vmul.f32 %v357, %v389
      %v394 = vmul.f32 %v358, %v390
      %v395 = vmul.f32 %v359, %v391
      %v396 = vld [vmem:[%s3] sm:$0x3]
      %v398 = vperm.slane %v396, 0
      %v399 = vperm.slane %v396, 1
      %v402 = vmul.f32 %v392, %v398
      %v403 = vmul.f32 %v393, %v399
      %v404 = vmul.f32 %v394, %v398
      %v405 = vmul.f32 %v395, %v399
      %v406 = vadd.f32 %v402, %v403
      %407 = vadd.xlane.f32.xlu0 %v406
      %v408 = vpop.xlane.xlu0 %407
      %v409 = vadd.f32 %v404, %v405
      %410 = vadd.xlane.f32.xlu0 %v409
      %v411 = vpop.xlane.xlu0 %410
      %412 = vst [vmem:[#allocation9] sm:$0xff] %v408
      %413 = vst [vmem:[#allocation9 + $0x8] sm:$0xff] %v411
    $region37: #{tpu_custom_call.1} parent=1 // pred_fallthru
      _
    // Predicated region
    $region38: #{tpu_custom_call.1} parent=1 // pred_check
      _
    $region39: #{tpu_custom_call.1} parent=1 // pred_check_branch
      %415 = sbr.rel (0) target = $region41
    $region40: #{tpu_custom_call.1} parent=1 // pred_region
      %417 = vsyncadd [#allocation5], 0
      %s418 = sshll.u32 [#allocation9], 4
      %s419 = int_to_ptr.vmem [resolvable:$true] %s418
      %s420 = sshll.u32 %s4, 4
      %s421 = int_to_ptr.hbm [resolvable:$true] %s420
      %426 = dma.vmem_to_hbm [thread:$0]  %s419, 256, %s421, [#allocation5], 128, 128, 8
    $region41: #{tpu_custom_call.1} parent=1 // pred_fallthru
      _
    // Predicated region
    $region42: #{tpu_custom_call.1} parent=1 // pred_check
      _
    $region43: #{tpu_custom_call.1} parent=1 // pred_check_branch
      %428 = sbr.rel (0) target = $region45
    $region44: #{tpu_custom_call.1} parent=1 // pred_region
      %430 = dma.done [#allocation5], 256
    $region45: #{tpu_custom_call.1} parent=1 // pred_fallthru
      _
    %431 = vsyncpa [#allocation4], 1
    %432 = vsyncpa [#allocation7], 1
    %433 = vsyncpa [#allocation5], 1

</llo_original>
